<compile_context>
chip_gen: v6e
topology: v6e:2x2x1
jax: 0.10.0
libtpu: 0.0.40
codegen_flags: <defaults>
</compile_context>

<pallas_src>
import functools
import math

import jax
import jax.numpy as jnp
from jax import lax
from jax.experimental import pallas as pl
from jax.experimental.pallas import tpu as pltpu

_LANES = 128
_SUBLANES = 8
_VREG = _LANES * _SUBLANES  # 1024 elements


def _bce_kernel(x_ref, y_ref, o_ref, acc_ref, *, inv_n, valid_rows, tile_rows,
                chunk_rows, steps_per_core, needs_mask):
    c = pl.program_id(0)   # TensorCore-parallel axis
    i = pl.program_id(1)   # sequential reduction axis

    @pl.when(i == 0)
    def _():
        acc_ref[...] = jnp.zeros_like(acc_ref)

    # Global block index *before* the index_map clamp; used only for masking
    # (rows >= valid_rows contribute exactly 0, so a clamped duplicate block
    # or a ragged overhang is harmless).
    gstep = c * steps_per_core + i
    row0 = gstep * tile_rows

    num_chunks = tile_rows // chunk_rows

    def chunk(j, acc):
        start = j * chunk_rows
        if num_chunks > 1:
            start = pl.multiple_of(start, chunk_rows)
        x = x_ref[pl.ds(start, chunk_rows), :].astype(jnp.float32)
        y = y_ref[pl.ds(start, chunk_rows), :].astype(jnp.float32)
        # Numerically stable BCE-with-logits (same formula PyTorch uses):
        #   max(x, 0) - x*y + log1p(exp(-|x|))
        # TODO(synk): on v6e/v7x the softplus term could be evaluated in bf16
        # on the EUP (~2x) if the tolerance allows; kept in f32 here.
        pe = jnp.maximum(x, 0.0) - x * y + jnp.log1p(jnp.exp(-jnp.abs(x)))
        if needs_mask:
            rows = (row0 + j * chunk_rows
                    + lax.broadcasted_iota(jnp.int32, (chunk_rows, _LANES), 0))
            pe = jnp.where(rows < valid_rows, pe, 0.0)
        # Fold down to one (8,128) vreg with cheap VPU adds; the expensive
        # cross-lane reduce never happens in the kernel at all.
        return acc + pe.reshape(chunk_rows // _SUBLANES, _SUBLANES, _LANES).sum(axis=0)

    zero = jnp.zeros((_SUBLANES, _LANES), jnp.float32)
    if num_chunks == 1:
        partial = chunk(0, zero)
    else:
        partial = lax.fori_loop(0, num_chunks, chunk, zero,
                                unroll=min(num_chunks, 4))

    acc_ref[...] += partial

    @pl.when(i == steps_per_core - 1)
    def _():
        # Write this core's (8,128) partial mean contribution (lane-dense,
        # unmasked vst); the wrapper sums the few remaining values.
        o_ref[0] = acc_ref[...] * jnp.float32(inv_n)


def bce_with_logits_loss(y_pred, y_true, *, max_tile_rows=4096,
                         target_chunk_rows=256):
    """Mean binary cross-entropy with logits over all elements (PyTorch semantics)."""
    assert y_pred.shape == y_true.shape
    total = int(y_pred.size)

    x_flat = y_pred.reshape(-1)
    y_flat = y_true.reshape(-1)  # keep the caller's (possibly narrow) dtype

    # Pad (<= 1023 elems) to a whole (8,128) vreg.  x gets a large negative
    # logit and y gets 0, so padded elements contribute ~0 loss.  When the size
    # is already aligned, no host-side copy happens.
    padded_total = ((total + _VREG - 1) // _VREG) * _VREG
    pad = padded_total - total
    if pad:
        x_flat = jnp.pad(x_flat, (0, pad), constant_values=-100.0)
        y_flat = jnp.pad(y_flat, (0, pad), constant_values=0)

    m = padded_total // _LANES                 # rows; multiple of 8
    x2 = x_flat.reshape(m, _LANES)             # lane-dense layout
    y2 = y_flat.reshape(m, _LANES)

    # Big row tiles amortize per-step overhead; streamed in sub-chunks inside
    # the kernel so nothing large ever lives in vregs.
    tm = min(max_tile_rows, m)                 # multiple of 8
    cr = math.gcd(tm, target_chunk_rows)       # divides tm, multiple of 8
    num_steps = pl.cdiv(m, tm)                 # real blocks covering the rows

    # Leading "parallel" axis: v7x runs the two halves on its two TensorCores;
    # on v5e/v6e (1 TC) it simply iterates.
    num_cores = 2 if num_steps >= 2 else 1
    spc = pl.cdiv(num_steps, num_cores)        # steps per core
    num_blocks = num_cores * spc               # may exceed num_steps by <= 1
    needs_mask = (num_blocks * tm != m)        # ragged overhang / duplicate block

    def data_index(c, i):
        # Clamp so a (possibly duplicate) trailing block never starts past the
        # array; its contribution is zeroed by the in-kernel row mask.
        return (jnp.minimum(c * spc + i, num_steps - 1), 0)

    kernel = functools.partial(
        _bce_kernel,
        inv_n=1.0 / total,
        valid_rows=m,
        tile_rows=tm,
        chunk_rows=cr,
        steps_per_core=spc,
        needs_mask=needs_mask,
    )

    cost = pl.CostEstimate(
        flops=6 * total,
        transcendentals=2 * total,             # exp + log1p per element
        bytes_accessed=(x2.size * x2.dtype.itemsize
                        + y2.size * y2.dtype.itemsize
                        + num_cores * _VREG * 4),
    )

    out = pl.pallas_call(
        kernel,
        out_shape=jax.ShapeDtypeStruct((num_cores, _SUBLANES, _LANES), jnp.float32),
        grid_spec=pltpu.PrefetchScalarGridSpec(
            num_scalar_prefetch=0,
            grid=(num_cores, spc),
            in_specs=[
                pl.BlockSpec((tm, _LANES), data_index),
                pl.BlockSpec((tm, _LANES), data_index),
            ],
            out_specs=pl.BlockSpec((1, _SUBLANES, _LANES), lambda c, i: (c, 0, 0)),
            scratch_shapes=[pltpu.VMEM((_SUBLANES, _LANES), jnp.float32)],
        ),
        compiler_params=pltpu.CompilerParams(
            dimension_semantics=("parallel", "arbitrary"),
        ),
        cost_estimate=cost,
    )(x2, y2)
    # TODO(synk): if xprof still shows DMA gaps at step boundaries on v7x, add
    # pipeline_mode=pl.Buffered(3) to the two input BlockSpecs.
    return jnp.sum(out)


def _reference(y_pred, y_true):
    x = y_pred.astype(jnp.float32)
    y = y_true.astype(jnp.float32)
    return jnp.mean(jnp.maximum(x, 0.0) - x * y + jnp.log1p(jnp.exp(-jnp.abs(x))))


if __name__ == "__main__":
    key = jax.random.PRNGKey(0)
    k1, k2, k3, k4, k5, k6 = jax.random.split(key, 6)

    # 1) Small NCHW inputs consistent with the module's forward (single block).
    y_pred = jax.random.normal(k1, (2, 4, 16, 16), dtype=jnp.float32)
    y_true = (jax.random.uniform(k2, (2, 4, 16, 16)) > 0.5).astype(jnp.float32)
    loss = jax.block_until_ready(bce_with_logits_loss(y_pred, y_true))
    ref = _reference(y_pred, y_true)
    assert jnp.allclose(loss, ref, rtol=1e-5, atol=1e-5), (loss, ref)

    # 2) Multi-step / two-core / ragged-tile path (small tiles force the grid).
    yp2 = jax.random.normal(k3, (5, 8, 128), dtype=jnp.float32)
    yt2 = (jax.random.uniform(k4, (5, 8, 128)) > 0.5).astype(jnp.float32)
    loss2 = jax.block_until_ready(bce_with_logits_loss(yp2, yt2, max_tile_rows=16))
    ref2 = _reference(yp2, yt2)
    assert jnp.allclose(loss2, ref2, rtol=1e-5, atol=1e-5), (loss2, ref2)

    # 3) Non-vreg-aligned size exercises the (-100, 0) tail padding.
    yp3 = jax.random.normal(k5, (3, 5, 7, 11), dtype=jnp.float32)
    yt3 = (jax.random.uniform(k6, (3, 5, 7, 11)) > 0.5).astype(jnp.float32)
    loss3 = jax.block_until_ready(bce_with_logits_loss(yp3, yt3))
    ref3 = _reference(yp3, yt3)
    assert jnp.allclose(loss3, ref3, rtol=1e-5, atol=1e-5), (loss3, ref3)

    print("KERNEL_OK")
</pallas_src>

<mosaic_0001>
module attributes {stable_mosaic.version = 11 : i64} {
  func.func @_bce_kernel(%arg0: i32, %arg1: i32, %arg2: memref<16x128xf32, #tpu.memory_space<vmem>>, %arg3: memref<16x128xf32, #tpu.memory_space<vmem>>, %arg4: memref<1x8x128xf32, #tpu.memory_space<vmem>>, %arg5: memref<8x128xf32, #tpu.memory_space<vmem>>) attributes {dimension_semantics = [#tpu.dimension_semantics<parallel>, #tpu.dimension_semantics<arbitrary>], iteration_bounds = array<i64: 1, 1>, scalar_prefetch = 0 : i64, scratch_operands = 1 : i64, tpu.core_type = #tpu.core_type<tc>, window_params = [{transform_indices = @transform_0, window_bounds = array<i64: 16, 128>}, {transform_indices = @transform_1, window_bounds = array<i64: 16, 128>}, {transform_indices = @transform_2, window_bounds = array<i64: 1, 8, 128>}]} {
    %c0_i32 = arith.constant 0 : i32
    %0 = arith.cmpi eq, %arg1, %c0_i32 : i32
    %1 = arith.extui %0 : i1 to i32
    %c0_i32_0 = arith.constant 0 : i32
    %2 = arith.cmpi ne, %1, %c0_i32_0 : i32
    scf.if %2 {
      %cst_13 = arith.constant 0.000000e+00 : f32
      %25 = vector.broadcast %cst_13 : f32 to vector<8x128xf32>
      %c0_14 = arith.constant 0 : index
      %c0_15 = arith.constant 0 : index
      %26 = vector.load %arg5[%c0_14, %c0_15] : memref<8x128xf32, #tpu.memory_space<vmem>>, vector<8x128xf32>
      tpu.vector_store %arg5[%c0_14, %c0_15], %25 {strides = array<i32>} : memref<8x128xf32, #tpu.memory_space<vmem>>, vector<8x128xf32>,
    } else {
    }
    %cst = arith.constant 0.000000e+00 : f32
    %3 = vector.broadcast %cst : f32 to vector<8x128xf32>
    %c0 = arith.constant 0 : index
    %c0_1 = arith.constant 0 : index
    %4 = vector.load %arg2[%c0, %c0_1] : memref<16x128xf32, #tpu.memory_space<vmem>>, vector<16x128xf32>
    %c0_2 = arith.constant 0 : index
    %c0_3 = arith.constant 0 : index
    %5 = vector.load %arg3[%c0_2, %c0_3] : memref<16x128xf32, #tpu.memory_space<vmem>>, vector<16x128xf32>
    %cst_4 = arith.constant 0.000000e+00 : f32
    %6 = vector.broadcast %cst_4 : f32 to vector<16x128xf32>
    %7 = arith.maximumf %4, %6 : vector<16x128xf32>
    %8 = arith.mulf %4, %5 : vector<16x128xf32>
    %9 = arith.subf %7, %8 : vector<16x128xf32>
    %10 = math.absf %4 : vector<16x128xf32>
    %cst_5 = arith.constant 0.000000e+00 : f32
    %11 = vector.broadcast %cst_5 : f32 to vector<16x128xf32>
    %12 = arith.subf %11, %10 : vector<16x128xf32>
    %13 = math.exp %12 : vector<16x128xf32>
    %14 = math.log1p %13 : vector<16x128xf32>
    %15 = arith.addf %9, %14 : vector<16x128xf32>
    %16 = vector.shape_cast %15 : vector<16x128xf32> to vector<2x8x128xf32>
    %cst_6 = arith.constant dense<0.000000e+00> : vector<8x128xf32>
    %17 = vector.multi_reduction <add>, %16, %cst_6 [0] : vector<2x8x128xf32> to vector<8x128xf32>
    %18 = arith.addf %3, %17 : vector<8x128xf32>
    %c0_7 = arith.constant 0 : index
    %c0_8 = arith.constant 0 : index
    %19 = vector.load %arg5[%c0_7, %c0_8] : memref<8x128xf32, #tpu.memory_space<vmem>>, vector<8x128xf32>
    %20 = arith.addf %19, %18 : vector<8x128xf32>
    %c0_9 = arith.constant 0 : index
    %c0_10 = arith.constant 0 : index
    %21 = vector.load %arg5[%c0_9, %c0_10] : memref<8x128xf32, #tpu.memory_space<vmem>>, vector<8x128xf32>
    tpu.vector_store %arg5[%c0_9, %c0_10], %20 {strides = array<i32>} : memref<8x128xf32, #tpu.memory_space<vmem>>, vector<8x128xf32>,
    %c0_i32_11 = arith.constant 0 : i32
    %22 = arith.cmpi eq, %arg1, %c0_i32_11 : i32
    %23 = arith.extui %22 : i1 to i32
    %c0_i32_12 = arith.constant 0 : i32
    %24 = arith.cmpi ne, %23, %c0_i32_12 : i32
    scf.if %24 {
      %c0_13 = arith.constant 0 : index
      %c0_14 = arith.constant 0 : index
      %25 = vector.load %arg5[%c0_13, %c0_14] : memref<8x128xf32, #tpu.memory_space<vmem>>, vector<8x128xf32>
      %cst_15 = arith.constant 4.8828125E-4 : f32
      %26 = vector.broadcast %cst_15 : f32 to vector<8x128xf32>
      %27 = arith.mulf %25, %26 : vector<8x128xf32>
      %c0_16 = arith.constant 0 : index
      %c0_17 = arith.constant 0 : index
      %c0_18 = arith.constant 0 : index
      %28 = vector.load %arg4[%c0_16, %c0_17, %c0_18] : memref<1x8x128xf32, #tpu.memory_space<vmem>>, vector<1x8x128xf32>
      %29 = vector.shape_cast %28 : vector<1x8x128xf32> to vector<8x128xf32>
      %30 = vector.shape_cast %27 : vector<8x128xf32> to vector<1x8x128xf32>
      tpu.vector_store %arg4[%c0_16, %c0_17, %c0_18], %30 {strides = array<i32>} : memref<1x8x128xf32, #tpu.memory_space<vmem>>, vector<1x8x128xf32>,
    } else {
    }
    return
  }
  func.func @transform_0(%arg0: i32, %arg1: i32) -> (i32, i32) {
    %c1_i32 = arith.constant 1 : i32
    %0 = arith.muli %arg0, %c1_i32 : i32
    %1 = arith.addi %0, %arg1 : i32
    %c0_i32 = arith.constant 0 : i32
    %2 = arith.minsi %1, %c0_i32 : i32
    %c0_i32_0 = arith.constant 0 : i32
    %c0_i32_1 = arith.constant 0 : i32
    return %2, %c0_i32_0 : i32, i32
  }
  func.func @transform_1(%arg0: i32, %arg1: i32) -> (i32, i32) {
    %c1_i32 = arith.constant 1 : i32
    %0 = arith.muli %arg0, %c1_i32 : i32
    %1 = arith.addi %0, %arg1 : i32
    %c0_i32 = arith.constant 0 : i32
    %2 = arith.minsi %1, %c0_i32 : i32
    %c0_i32_0 = arith.constant 0 : i32
    %c0_i32_1 = arith.constant 0 : i32
    return %2, %c0_i32_0 : i32, i32
  }
  func.func @transform_2(%arg0: i32, %arg1: i32) -> (i32, i32, i32) {
    %c0_i32 = arith.constant 0 : i32
    %c0_i32_0 = arith.constant 0 : i32
    %c0_i32_1 = arith.constant 0 : i32
    return %arg0, %c0_i32, %c0_i32_0 : i32, i32, i32
  }
}

</mosaic_0001>

<llo_original>
// kernel: tpu_custom_call.1
$region0: #{tpu_custom_call.1}
  #allocation0 [shape = 'u32[]', space=smem, size = 0x4, offset = 0x4, fixed_abs, tag = 'smem constant byte address 0x4 - core index']
  #allocation1 [shape = 'u32[144,128]{1,0:T(1,128)}', space=vmem, size = 0x12000, scoped, tag = 'internal scratch']
  #allocation2 [shape = 'f32[8,128]{1,0:T(8,128)}', space=vmem, size = 0x1000, scoped, tag = 'scratch operand']
  %s0 = inlined_call_operand.hbm [shape: f32[16,128], index: 0, kind: input, shape index: {}]
  %s1 = inlined_call_operand.hbm [shape: f32[16,128], index: 1, kind: input, shape index: {}]
  %s2 = inlined_call_operand.hbm [shape: f32[1,8,128], index: 2, kind: output, shape index: {}]
  %s3 = sld [smem:[#allocation0]]
  $region34: #{tpu_custom_call.1} parent=0
    _
  %s5 = ssub.s32 1, %s3
  %s6 = scalar_select 0, %s5, %s3
  $region1: #{tpu_custom_call.1} parent=0
    #allocation3 [shape = 'u8[8192]{0}', space=vmem, size = 0x2000, scoped, tag = 'input window, operand 0, single buffered']
    #allocation4 [shape = 's32[1]{0}', space=sflag, size = 0x4, scoped, tag = 'scoped memory for tpu_custom_call.1']
    #allocation5 [shape = 's32[1]{0}', space=sflag, size = 0x4, scoped, tag = 'scoped memory for tpu_custom_call.1']
    #allocation6 [shape = 'u8[8192]{0}', space=vmem, size = 0x2000, scoped, tag = 'input window, operand 1, single buffered']
    #allocation7 [shape = 's32[1]{0}', space=sflag, size = 0x4, scoped, tag = 'scoped memory for tpu_custom_call.1']
    #allocation8 [shape = 'u8[4096]{0}', space=vmem, size = 0x1000, scoped, tag = 'output window, operand 0, single buffered']
    %7 = vsyncpa [#allocation4], 0
    %8 = vsyncpa [#allocation7], 0
    %9 = vsyncpa [#allocation5], 0
    // Predicated region
    $region2: #{tpu_custom_call.1} parent=1 // pred_check
      _
    $region3: #{tpu_custom_call.1} parent=1 // pred_check_branch
      %11 = sbr.rel (0) target = $region5
    $region4: #{tpu_custom_call.1} parent=1 // pred_region
      %s12 = sadd.s32 0, 0
      %p13 = scmp.lt.s32.totalorder %s12, 0
      %s14 = scalar_select %p13, %s12, 0
      %s15 = smul.u32 2, %s14
      %s17 = ssub.s32 256, 256
      %18 = vsyncadd [#allocation4], %s17
      %s19 = smul.addr %s15, 128
      %s20 = scalar_lea.hbm %s0, %s19
      %s21 = sshll.u32 [#allocation3], 4
      %s22 = int_to_ptr.vmem [resolvable:$true] %s21
      %27 = dma.hbm_to_vmem [thread:$0]  %s20, 256, %s22, [#allocation4], 128, 128, 8
    $region5: #{tpu_custom_call.1} parent=1 // pred_fallthru
      _
    // Predicated region
    $region6: #{tpu_custom_call.1} parent=1 // pred_check
      _
    $region7: #{tpu_custom_call.1} parent=1 // pred_check_branch
      %29 = sbr.rel (0) target = $region9
    $region8: #{tpu_custom_call.1} parent=1 // pred_region
      %s30 = sadd.s32 0, 0
      %p31 = scmp.lt.s32.totalorder %s30, 0
      %s32 = scalar_select %p31, %s30, 0
      %s33 = smul.u32 2, %s32
      %s35 = ssub.s32 256, 256
      %36 = vsyncadd [#allocation7], %s35
      %s37 = smul.addr %s33, 128
      %s38 = scalar_lea.hbm %s1, %s37
      %s39 = sshll.u32 [#allocation6], 4
      %s40 = int_to_ptr.vmem [resolvable:$true] %s39
      %45 = dma.hbm_to_vmem [thread:$0]  %s38, 256, %s40, [#allocation7], 128, 128, 8
    $region9: #{tpu_custom_call.1} parent=1 // pred_fallthru
      _
    // Predicated region
    $region10: #{tpu_custom_call.1} parent=1 // pred_check
      _
    $region11: #{tpu_custom_call.1} parent=1 // pred_check_branch
      %47 = sbr.rel (0) target = $region13
    $region12: #{tpu_custom_call.1} parent=1 // pred_region
      %48 = dma.done [#allocation4], 256
    $region13: #{tpu_custom_call.1} parent=1 // pred_fallthru
      _
    // Predicated region
    $region14: #{tpu_custom_call.1} parent=1 // pred_check
      _
    $region15: #{tpu_custom_call.1} parent=1 // pred_check_branch
      %50 = sbr.rel (0) target = $region17
    $region16: #{tpu_custom_call.1} parent=1 // pred_region
      %51 = dma.done [#allocation7], 256
    $region17: #{tpu_custom_call.1} parent=1 // pred_fallthru
      _
    %s52 = sadd.s32 0, 0
    %p53 = scmp.lt.s32.totalorder %s52, 0
    %s54 = scalar_select %p53, %s52, 0
    %s55 = smul.u32 2, %s54
    %s56 = sadd.s32 0, 0
    %p57 = scmp.lt.s32.totalorder %s56, 0
    %s58 = scalar_select %p57, %s56, 0
    %s59 = smul.u32 2, %s58
    %p60 = scmp.eq.s32.totalorder 0, 0
    // Predicated region
    $region18: #{tpu_custom_call.1} parent=1 // pred_check
      %p61 = pneg %p60
    $region19: #{tpu_custom_call.1} parent=1 // pred_check_branch
      %63 = sbr.rel (%p61) target = $region21
    $region20: #{tpu_custom_call.1} parent=1 // pred_region
      %64 = vst [vmem:[#allocation2] sm:$0xff] 0.0
    $region21: #{tpu_custom_call.1} parent=1 // pred_fallthru
      _
    %v65 = vld [vmem:[#allocation3] sm:$0xff]
    %v66 = vld [vmem:[#allocation3 + $0x8] sm:$0xff]
    %v67 = vld [vmem:[#allocation6] sm:$0xff]
    %v68 = vld [vmem:[#allocation6 + $0x8] sm:$0xff]
    %v69 = vmax.f32 %v65, 0.0
    %v70 = vmax.f32 %v66, 0.0
    %v71 = vmul.f32 %v65, %v67
    %v72 = vmul.f32 %v66, %v68
    %v73 = vsub.f32 %v69, %v71
    %v74 = vsub.f32 %v70, %v72
    %v75 = vand.u32 2147483647, %v65
    %v76 = vand.u32 2147483647, %v66
    %v77 = vsub.f32 0.0, %v75
    %v78 = vsub.f32 0.0, %v76
    %v79 = vmul.f32 %v77, 1.442695
    %v80 = vpow.pop %v79
    %v81 = vmul.f32 %v78, 1.442695
    %v82 = vpow.pop %v81
    %v83 = vadd.f32 %v80, 1.0
    %v84 = vlog2.pop %v83
    %v85 = vmul.f32 %v84, 0.6931472
    %v86 = vmul.f32 -0.5, %v80
    %v87 = vadd.f32 %v86, 1.0
    %v88 = vmul.f32 %v87, %v80
    %v89 = vand.u32 2147483647, %v80
    %vm90 = vcmp.lt.f32.partialorder %v89, 0.0004427343
    %v91 = vsel %vm90, %v88, %v85
    %v92 = vadd.f32 %v82, 1.0
    %v93 = vlog2.pop %v92
    %v94 = vmul.f32 %v93, 0.6931472
    %v95 = vmul.f32 -0.5, %v82
    %v96 = vadd.f32 %v95, 1.0
    %v97 = vmul.f32 %v96, %v82
    %v98 = vand.u32 2147483647, %v82
    %vm99 = vcmp.lt.f32.partialorder %v98, 0.0004427343
    %v100 = vsel %vm99, %v97, %v94
    %v101 = vadd.f32 %v73, %v91
    %v102 = vadd.f32 %v74, %v100
    %v103 = vadd.f32 %v101, %v102
    %v104 = vadd.f32 %v103, 0.0
    %v105 = vld [vmem:[#allocation2] sm:$0xff]
    %v106 = vadd.f32 %v105, %v104
    %107 = vst [vmem:[#allocation2] sm:$0xff] %v106
    // Predicated region
    $region22: #{tpu_custom_call.1} parent=1 // pred_check
      %p108 = pneg %p60
    $region23: #{tpu_custom_call.1} parent=1 // pred_check_branch
      %110 = sbr.rel (%p108) target = $region25
    $region24: #{tpu_custom_call.1} parent=1 // pred_region
      %v111 = vld [vmem:[#allocation2] sm:$0xff]
      %v112 = vmul.f32 %v111, 0.00048828125
      %113 = vst [vmem:[#allocation8] sm:$0xff] %v112
    $region25: #{tpu_custom_call.1} parent=1 // pred_fallthru
      _
    // Predicated region
    $region26: #{tpu_custom_call.1} parent=1 // pred_check
      _
    $region27: #{tpu_custom_call.1} parent=1 // pred_check_branch
      %115 = sbr.rel (0) target = $region29
    $region28: #{tpu_custom_call.1} parent=1 // pred_region
      %s117 = ssub.s32 128, 128
      %118 = vsyncadd [#allocation5], %s117
      %s120 = sshll.u32 [#allocation8], 4
      %s121 = int_to_ptr.vmem [resolvable:$true] %s120
      %123 = dma.vmem_to_hbm [thread:$0]  %s121, 128, %s2, [#allocation5]
    $region29: #{tpu_custom_call.1} parent=1 // pred_fallthru
      _
    // Predicated region
    $region30: #{tpu_custom_call.1} parent=1 // pred_check
      _
    $region31: #{tpu_custom_call.1} parent=1 // pred_check_branch
      %125 = sbr.rel (0) target = $region33
    $region32: #{tpu_custom_call.1} parent=1 // pred_region
      %126 = dma.done [#allocation5], 128
    $region33: #{tpu_custom_call.1} parent=1 // pred_fallthru
      _
    %127 = vsyncpa [#allocation4], 1
    %128 = vsyncpa [#allocation7], 1
    %129 = vsyncpa [#allocation5], 1

</llo_original>
